<compile_context>
chip_gen: v7x
topology: tpu7x:2x2x1
jax: 0.10.0
libtpu: 0.0.40
codegen_flags: <defaults>
</compile_context>

<pallas_src>
import jax
import jax.numpy as jnp
from jax.experimental import pallas as pl
from jax.experimental.pallas import tpu as pltpu

N_HIDDEN = 4              # fc1..fc4 (the ReLU layers); layer index 4 is `predict`
N_LAYERS = N_HIDDEN + 1
D_PAD = 64                # padded feature width = max layer width (13, 32, 64, 32, 16 <= 64)


def mlp_kernel(x_ref, w_ref, b_ref, out_ref):
    """x_ref:  [D_PAD, TB] bf16  (features on sublanes, batch on lanes)
    w_ref:  [5, D_PAD, D_PAD] bf16, each W stored [out, in]; predict weights
            live in column 0 of slab 4.
    b_ref:  [5, D_PAD, 1] f32
    out_ref:[1, TB] f32   (lane-dense output row for this batch tile)."""
    h_lo = x_ref[...]          # bf16 activations fed to the MXU
    h_hi = None                # f32 activations (bias-add / ReLU precision)
    for i in range(N_HIDDEN):  # statically unrolled: fc1..fc4
        z = jnp.dot(w_ref[i], h_lo, preferred_element_type=jnp.float32)   # [D, TB] f32
        h_hi = jnp.maximum(z + b_ref[i], 0.0)      # f32 bias + ReLU on the VPU
        h_lo = h_hi.astype(jnp.bfloat16)           # bf16 feed for the next MXU dot
    # `predict` (16 -> 1): broadcast-mul + sublane reduction (VPU/XLU) instead
    # of a 5th serialized MXU round-trip; padded rows of h_hi and w5 are zero.
    w5 = w_ref[N_HIDDEN][:, 0:1].astype(jnp.float32)   # [D, 1] predict weights (col 0)
    b5 = b_ref[N_HIDDEN][0:1, 0:1]                     # [1, 1] predict bias
    y = jnp.sum(h_hi * w5, axis=0, keepdims=True) + b5     # [1, TB], lane-dense
    out_ref[...] = y.astype(out_ref.dtype)


def _round_up(n, m):
    return ((n + m - 1) // m) * m


def pack_params(params):
    """Pack the 5 (W [in,out], b [1,out]) pairs into one zero-padded bf16
    weight slab (stored [out, in], i.e. transposed) and one f32 bias slab.
    The predict layer (out_features == 1) is stored as column 0 of w_slab[4].
    Call ONCE; the forward path takes the packed slabs directly."""
    w_slab = jnp.zeros((N_LAYERS, D_PAD, D_PAD), jnp.float32)
    b_slab = jnp.zeros((N_LAYERS, D_PAD, 1), jnp.float32)
    for i, (w, b) in enumerate(params[:N_HIDDEN]):
        fin, fout = w.shape
        w_slab = w_slab.at[i, :fout, :fin].set(w.T)     # [out, in]
        b_slab = b_slab.at[i, :fout, 0].set(b[0])
    w5, b5 = params[N_HIDDEN]
    assert w5.shape[1] == 1, "packed predict layer assumes n_output == 1"
    w_slab = w_slab.at[N_HIDDEN, : w5.shape[0], 0].set(w5[:, 0])
    b_slab = b_slab.at[N_HIDDEN, 0, 0].set(b5[0, 0])
    return w_slab.astype(jnp.bfloat16), b_slab


def net_forward(x, w_slab, b_slab, *, batch_tile=1024):
    """x: [B, cols] float32. w_slab/b_slab: packed slabs from pack_params."""
    B, cols = x.shape
    assert cols <= D_PAD, "feature count must fit the padded width"

    # Batch lives on the lane axis -> tiles are multiples of 128.
    # Large batches: big tiles (amortize grid-step overhead + MXU fill/drain),
    # but capped so the grid has >= 2 blocks and both v7x TensorCores work.
    # Small batches: a single 128-aligned block.
    if B > 256:
        tb = min(batch_tile, _round_up(pl.cdiv(B, 2), 128))
    else:
        tb = _round_up(max(B, 1), 128)
    n_blocks = pl.cdiv(B, tb)
    b_pad = n_blocks * tb

    # Pad + transpose straight into the bf16 layout the kernel consumes
    # (no intermediate f32 padded buffer).
    x_pad = (jnp.zeros((D_PAD, b_pad), jnp.bfloat16)
             .at[:cols, :B].set(x.astype(jnp.bfloat16).T))

    out = pl.pallas_call(
        mlp_kernel,
        out_shape=jax.ShapeDtypeStruct((1, b_pad), jnp.float32),
        grid=(n_blocks,),
        in_specs=[
            pl.BlockSpec((D_PAD, tb), lambda i: (0, i)),        # batch tile of x
            pl.BlockSpec(w_slab.shape, lambda i: (0, 0, 0)),    # resident weight slab
            pl.BlockSpec(b_slab.shape, lambda i: (0, 0, 0)),    # resident bias slab
        ],
        out_specs=pl.BlockSpec((1, tb), lambda i: (0, i)),      # lane-dense output row
        compiler_params=pltpu.CompilerParams(
            dimension_semantics=("parallel",)),   # batch tiles shard across v7x's 2 TCs
    )(x_pad, w_slab, b_slab)
    return out[0, :B].reshape(B, 1)


def init_params(key, cols, size_hidden, n_output):
    """Deterministic init mimicking nn.Linear's U(-1/sqrt(fan_in), 1/sqrt(fan_in)).
    Weights stored as [in_features, out_features]; biases as [1, out_features]."""
    dims = [cols, size_hidden, size_hidden * 2, size_hidden, 16, n_output]
    params = []
    for i in range(len(dims) - 1):
        fan_in, fan_out = dims[i], dims[i + 1]
        key, kw, kb = jax.random.split(key, 3)
        bound = 1.0 / jnp.sqrt(jnp.float32(fan_in))
        w = jax.random.uniform(kw, (fan_in, fan_out), jnp.float32, -bound, bound)
        b = jax.random.uniform(kb, (1, fan_out), jnp.float32, -bound, bound)
        params.append((w, b))
    return params


def reference_forward_f32(x, params):
    """Pure-f32 forward matching the PyTorch module semantics."""
    h = x
    for i, (w, b) in enumerate(params):
        h = jnp.dot(h, w, precision=jax.lax.Precision.HIGHEST) + b
        if i < len(params) - 1:
            h = jnp.maximum(h, 0.0)
    return h


def reference_forward_bf16(x, params):
    """Reference with the kernel's exact mixed precision: bf16 inputs /
    weights / inter-layer activations, f32 accumulation, f32 bias + ReLU,
    f32 predict layer on bf16-rounded weights."""
    def q(a):
        return a.astype(jnp.bfloat16).astype(jnp.float32)
    h_lo = q(x)
    h_hi = None
    for w, b in params[:N_HIDDEN]:
        z = jnp.dot(h_lo, q(w), precision=jax.lax.Precision.HIGHEST)
        h_hi = jnp.maximum(z + b, 0.0)
        h_lo = q(h_hi)
    w5, b5 = params[N_HIDDEN]
    return jnp.dot(h_hi, q(w5), precision=jax.lax.Precision.HIGHEST) + b5


if __name__ == "__main__":
    cols = 13          # Boston housing feature count
    size_hidden = 32
    n_output = 1
    batch = 8

    key = jax.random.PRNGKey(0)
    key, kx = jax.random.split(key)
    x = jax.random.normal(kx, (batch, cols), jnp.float32)
    params = init_params(key, cols, size_hidden, n_output)

    # Pack once, outside the per-forward path.
    w_slab, b_slab = pack_params(params)
    w_slab, b_slab = jax.block_until_ready((w_slab, b_slab))

    fwd = jax.jit(net_forward)
    out = jax.block_until_ready(fwd(x, w_slab, b_slab))
    assert out.shape == (batch, n_output), out.shape

    # Tight check vs. a reference with the kernel's exact mixed precision.
    ref_q = reference_forward_bf16(x, params)
    assert jnp.allclose(out, ref_q, atol=1e-3, rtol=1e-3), \
        "mismatch vs bf16-matched reference"

    # Sanity check vs. pure-f32 module semantics (difference is bf16 rounding only).
    ref_f32 = reference_forward_f32(x, params)
    assert jnp.allclose(out, ref_f32, atol=5e-2, rtol=5e-2), \
        "mismatch vs f32 reference"

    print("KERNEL_OK")
</pallas_src>

<mosaic_0001>
module attributes {stable_mosaic.version = 11 : i64} {
  func.func @mlp_kernel(%arg0: i32, %arg1: memref<64x128xbf16, #tpu.memory_space<vmem>>, %arg2: memref<5x64x64xbf16, #tpu.memory_space<vmem>>, %arg3: memref<5x64x1xf32, #tpu.memory_space<vmem>>, %arg4: memref<1x128xf32, #tpu.memory_space<vmem>>) attributes {dimension_semantics = [#tpu.dimension_semantics<parallel>], iteration_bounds = array<i64: 1>, scalar_prefetch = 0 : i64, scratch_operands = 0 : i64, tpu.core_type = #tpu.core_type<tc>, window_params = [{transform_indices = @transform_0, window_bounds = array<i64: 64, 128>}, {pipeline_mode = #tpu.pipeline_mode<synchronous>, transform_indices = @transform_1, window_bounds = array<i64: 5, 64, 64>}, {pipeline_mode = #tpu.pipeline_mode<synchronous>, transform_indices = @transform_2, window_bounds = array<i64: 5, 64, 1>}, {transform_indices = @transform_3, window_bounds = array<i64: 1, 128>}]} {
    %c0 = arith.constant 0 : index
    %c0_0 = arith.constant 0 : index
    %0 = vector.load %arg1[%c0, %c0_0] : memref<64x128xbf16, #tpu.memory_space<vmem>>, vector<64x128xbf16>
    %c0_1 = arith.constant 0 : index
    %c0_2 = arith.constant 0 : index
    %c0_3 = arith.constant 0 : index
    %1 = vector.load %arg2[%c0_1, %c0_2, %c0_3] : memref<5x64x64xbf16, #tpu.memory_space<vmem>>, vector<1x64x64xbf16>
    %2 = vector.shape_cast %1 : vector<1x64x64xbf16> to vector<64x64xbf16>
    %cst = arith.constant dense<0.000000e+00> : vector<64x128xf32>
    %3 = tpu.matmul %2, %0, %cst {dimension_numbers = #tpu.dot_dimension_numbers<[1], [0], [0], [1], [0, 0, 1, 1], [], []>} : vector<64x64xbf16>, vector<64x128xbf16>, vector<64x128xf32> -> vector<64x128xf32>
    %c0_4 = arith.constant 0 : index
    %c0_5 = arith.constant 0 : index
    %c0_6 = arith.constant 0 : index
    %4 = vector.load %arg3[%c0_4, %c0_5, %c0_6] : memref<5x64x1xf32, #tpu.memory_space<vmem>>, vector<1x64x1xf32>
    %5 = vector.shape_cast %4 : vector<1x64x1xf32> to vector<64x1xf32>
    %6 = vector.broadcast %5 : vector<64x1xf32> to vector<64x128xf32>
    %7 = arith.addf %3, %6 : vector<64x128xf32>
    %cst_7 = arith.constant 0.000000e+00 : f32
    %8 = vector.broadcast %cst_7 : f32 to vector<64x128xf32>
    %9 = arith.maximumf %7, %8 : vector<64x128xf32>
    %10 = arith.truncf %9 : vector<64x128xf32> to vector<64x128xbf16>
    %c1 = arith.constant 1 : index
    %c0_8 = arith.constant 0 : index
    %c0_9 = arith.constant 0 : index
    %11 = vector.load %arg2[%c1, %c0_8, %c0_9] : memref<5x64x64xbf16, #tpu.memory_space<vmem>>, vector<1x64x64xbf16>
    %12 = vector.shape_cast %11 : vector<1x64x64xbf16> to vector<64x64xbf16>
    %cst_10 = arith.constant dense<0.000000e+00> : vector<64x128xf32>
    %13 = tpu.matmul %12, %10, %cst_10 {dimension_numbers = #tpu.dot_dimension_numbers<[1], [0], [0], [1], [0, 0, 1, 1], [], []>} : vector<64x64xbf16>, vector<64x128xbf16>, vector<64x128xf32> -> vector<64x128xf32>
    %c1_11 = arith.constant 1 : index
    %c0_12 = arith.constant 0 : index
    %c0_13 = arith.constant 0 : index
    %14 = vector.load %arg3[%c1_11, %c0_12, %c0_13] : memref<5x64x1xf32, #tpu.memory_space<vmem>>, vector<1x64x1xf32>
    %15 = vector.shape_cast %14 : vector<1x64x1xf32> to vector<64x1xf32>
    %16 = vector.broadcast %15 : vector<64x1xf32> to vector<64x128xf32>
    %17 = arith.addf %13, %16 : vector<64x128xf32>
    %cst_14 = arith.constant 0.000000e+00 : f32
    %18 = vector.broadcast %cst_14 : f32 to vector<64x128xf32>
    %19 = arith.maximumf %17, %18 : vector<64x128xf32>
    %20 = arith.truncf %19 : vector<64x128xf32> to vector<64x128xbf16>
    %c2 = arith.constant 2 : index
    %c0_15 = arith.constant 0 : index
    %c0_16 = arith.constant 0 : index
    %21 = vector.load %arg2[%c2, %c0_15, %c0_16] : memref<5x64x64xbf16, #tpu.memory_space<vmem>>, vector<1x64x64xbf16>
    %22 = vector.shape_cast %21 : vector<1x64x64xbf16> to vector<64x64xbf16>
    %cst_17 = arith.constant dense<0.000000e+00> : vector<64x128xf32>
    %23 = tpu.matmul %22, %20, %cst_17 {dimension_numbers = #tpu.dot_dimension_numbers<[1], [0], [0], [1], [0, 0, 1, 1], [], []>} : vector<64x64xbf16>, vector<64x128xbf16>, vector<64x128xf32> -> vector<64x128xf32>
    %c2_18 = arith.constant 2 : index
    %c0_19 = arith.constant 0 : index
    %c0_20 = arith.constant 0 : index
    %24 = vector.load %arg3[%c2_18, %c0_19, %c0_20] : memref<5x64x1xf32, #tpu.memory_space<vmem>>, vector<1x64x1xf32>
    %25 = vector.shape_cast %24 : vector<1x64x1xf32> to vector<64x1xf32>
    %26 = vector.broadcast %25 : vector<64x1xf32> to vector<64x128xf32>
    %27 = arith.addf %23, %26 : vector<64x128xf32>
    %cst_21 = arith.constant 0.000000e+00 : f32
    %28 = vector.broadcast %cst_21 : f32 to vector<64x128xf32>
    %29 = arith.maximumf %27, %28 : vector<64x128xf32>
    %30 = arith.truncf %29 : vector<64x128xf32> to vector<64x128xbf16>
    %c3 = arith.constant 3 : index
    %c0_22 = arith.constant 0 : index
    %c0_23 = arith.constant 0 : index
    %31 = vector.load %arg2[%c3, %c0_22, %c0_23] : memref<5x64x64xbf16, #tpu.memory_space<vmem>>, vector<1x64x64xbf16>
    %32 = vector.shape_cast %31 : vector<1x64x64xbf16> to vector<64x64xbf16>
    %cst_24 = arith.constant dense<0.000000e+00> : vector<64x128xf32>
    %33 = tpu.matmul %32, %30, %cst_24 {dimension_numbers = #tpu.dot_dimension_numbers<[1], [0], [0], [1], [0, 0, 1, 1], [], []>} : vector<64x64xbf16>, vector<64x128xbf16>, vector<64x128xf32> -> vector<64x128xf32>
    %c3_25 = arith.constant 3 : index
    %c0_26 = arith.constant 0 : index
    %c0_27 = arith.constant 0 : index
    %34 = vector.load %arg3[%c3_25, %c0_26, %c0_27] : memref<5x64x1xf32, #tpu.memory_space<vmem>>, vector<1x64x1xf32>
    %35 = vector.shape_cast %34 : vector<1x64x1xf32> to vector<64x1xf32>
    %36 = vector.broadcast %35 : vector<64x1xf32> to vector<64x128xf32>
    %37 = arith.addf %33, %36 : vector<64x128xf32>
    %cst_28 = arith.constant 0.000000e+00 : f32
    %38 = vector.broadcast %cst_28 : f32 to vector<64x128xf32>
    %39 = arith.maximumf %37, %38 : vector<64x128xf32>
    %c4 = arith.constant 4 : index
    %c0_29 = arith.constant 0 : index
    %c0_30 = arith.constant 0 : index
    %40 = vector.load %arg2[%c4, %c0_29, %c0_30] : memref<5x64x64xbf16, #tpu.memory_space<vmem>>, vector<1x64x64xbf16>
    %41 = vector.shape_cast %40 : vector<1x64x64xbf16> to vector<64x64xbf16>
    %42 = vector.extract_strided_slice %41 {offsets = [0, 0], sizes = [64, 1], strides = [1, 1]} : vector<64x64xbf16> to vector<64x1xbf16>
    %43 = arith.extf %42 : vector<64x1xbf16> to vector<64x1xf32>
    %c4_31 = arith.constant 4 : index
    %c0_32 = arith.constant 0 : index
    %c0_33 = arith.constant 0 : index
    %44 = vector.load %arg3[%c4_31, %c0_32, %c0_33] : memref<5x64x1xf32, #tpu.memory_space<vmem>>, vector<1x64x1xf32>
    %45 = vector.shape_cast %44 : vector<1x64x1xf32> to vector<64x1xf32>
    %46 = vector.extract_strided_slice %45 {offsets = [0, 0], sizes = [1, 1], strides = [1, 1]} : vector<64x1xf32> to vector<1x1xf32>
    %47 = vector.broadcast %43 : vector<64x1xf32> to vector<64x128xf32>
    %48 = arith.mulf %39, %47 : vector<64x128xf32>
    %cst_34 = arith.constant dense<0.000000e+00> : vector<128xf32>
    %49 = vector.multi_reduction <add>, %48, %cst_34 [0] : vector<64x128xf32> to vector<128xf32>
    %50 = vector.shape_cast %49 : vector<128xf32> to vector<1x128xf32>
    %51 = vector.broadcast %46 : vector<1x1xf32> to vector<1x128xf32>
    %52 = arith.addf %50, %51 : vector<1x128xf32>
    %c0_35 = arith.constant 0 : index
    %c0_36 = arith.constant 0 : index
    %53 = vector.load %arg4[%c0_35, %c0_36] : memref<1x128xf32, #tpu.memory_space<vmem>>, vector<1x128xf32>
    tpu.vector_store %arg4[%c0_35, %c0_36], %52 {strides = array<i32>} : memref<1x128xf32, #tpu.memory_space<vmem>>, vector<1x128xf32>,
    return
  }
  func.func @transform_0(%arg0: i32) -> (i32, i32) {
    %c0_i32 = arith.constant 0 : i32
    %c0_i32_0 = arith.constant 0 : i32
    return %c0_i32, %arg0 : i32, i32
  }
  func.func @transform_1(%arg0: i32) -> (i32, i32, i32) {
    %c0_i32 = arith.constant 0 : i32
    %c0_i32_0 = arith.constant 0 : i32
    %c0_i32_1 = arith.constant 0 : i32
    %c0_i32_2 = arith.constant 0 : i32
    return %c0_i32, %c0_i32_0, %c0_i32_1 : i32, i32, i32
  }
  func.func @transform_2(%arg0: i32) -> (i32, i32, i32) {
    %c0_i32 = arith.constant 0 : i32
    %c0_i32_0 = arith.constant 0 : i32
    %c0_i32_1 = arith.constant 0 : i32
    %c0_i32_2 = arith.constant 0 : i32
    return %c0_i32, %c0_i32_0, %c0_i32_1 : i32, i32, i32
  }
  func.func @transform_3(%arg0: i32) -> (i32, i32) {
    %c0_i32 = arith.constant 0 : i32
    %c0_i32_0 = arith.constant 0 : i32
    return %c0_i32, %arg0 : i32, i32
  }
}

</mosaic_0001>

<llo_original>
// kernel: net_forward.1
$region0: #{net_forward.1}
  #allocation0 [shape = 'u32[]', space=smem, size = 0x4, offset = 0x4, fixed_abs, tag = 'smem constant byte address 0x4 - core index']
  #allocation1 [shape = 'u32[144,128]{1,0:T(1,128)}', space=vmem, size = 0x12000, scoped, tag = 'internal scratch']
  %s0 = inlined_call_operand.vmem [shape: bf16[64,128], index: 0, kind: input, shape index: {}]
  %s1 = inlined_call_operand.vmem [shape: bf16[5,64,64], index: 1, kind: input, shape index: {}]
  %s2 = inlined_call_operand.vmem [shape: f32[5,64,1], index: 2, kind: input, shape index: {}]
  %s3 = inlined_call_operand.vmem [shape: f32[1,128], index: 3, kind: output, shape index: {}]
  %s4 = sld [smem:[#allocation0]]
  $region22: #{net_forward.1} parent=0
    _
  %s6 = ssub.s32 1, %s4
  %s7 = scalar_select 0, %s6, %s4
  // Predicated region
  $region2: #{net_forward.1} parent=0 // pred_check
    _
  $region3: #{net_forward.1} parent=0 // pred_check_branch
    %9 = sbr.rel (0) target = $region5
  $region4: #{net_forward.1} parent=0 // pred_region
    _
  $region5: #{net_forward.1} parent=0 // pred_fallthru
    _
  // Predicated region
  $region6: #{net_forward.1} parent=0 // pred_check
    _
  $region7: #{net_forward.1} parent=0 // pred_check_branch
    %11 = sbr.rel (0) target = $region9
  $region8: #{net_forward.1} parent=0 // pred_region
    _
  $region9: #{net_forward.1} parent=0 // pred_fallthru
    _
  // Predicated region
  $region10: #{net_forward.1} parent=0 // pred_check
    _
  $region11: #{net_forward.1} parent=0 // pred_check_branch
    %13 = sbr.rel (0) target = $region13
  $region12: #{net_forward.1} parent=0 // pred_region
    _
  $region13: #{net_forward.1} parent=0 // pred_fallthru
    _
  %v15 = vld [vmem:[%s0] sm:$0xf]
  %v16 = vld [vmem:[%s0 + $0x4] sm:$0xf]
  %v17 = vld [vmem:[%s0 + $0x8] sm:$0xf]
  %v18 = vld [vmem:[%s0 + $0xc] sm:$0xf]
  %v19 = vld [vmem:[%s0 + $0x10] sm:$0xf]
  %v20 = vld [vmem:[%s0 + $0x14] sm:$0xf]
  %v21 = vld [vmem:[%s0 + $0x18] sm:$0xf]
  %v22 = vld [vmem:[%s0 + $0x1c] sm:$0xf]
  %v23 = vld [vmem:[%s1] sm:$0xf]
  %v24 = vld [vmem:[%s1 + $0x4] sm:$0xf]
  %v25 = vld [vmem:[%s1 + $0x8] sm:$0xf]
  %v26 = vld [vmem:[%s1 + $0xc] sm:$0xf]
  %v27 = vld [vmem:[%s1 + $0x10] sm:$0xf]
  %v28 = vld [vmem:[%s1 + $0x14] sm:$0xf]
  %v29 = vld [vmem:[%s1 + $0x18] sm:$0xf]
  %v30 = vld [vmem:[%s1 + $0x1c] sm:$0xf]
  %v31 = vld [vmem:[%s2] sm:$0xff]
  %v32 = vld [vmem:[%s2 + $0x8] sm:$0xff]
  %v33 = vld [vmem:[%s2 + $0x10] sm:$0xff]
  %v34 = vld [vmem:[%s2 + $0x18] sm:$0xff]
  %v35 = vld [vmem:[%s2 + $0x20] sm:$0xff]
  %v36 = vld [vmem:[%s2 + $0x28] sm:$0xff]
  %v37 = vld [vmem:[%s2 + $0x30] sm:$0xff]
  %v38 = vld [vmem:[%s2 + $0x38] sm:$0xff]
  %40 = vset.pattern.permute.xlu0 0
  %41 = vperm.xlu0 %40, %v31
  %v42 = vpop.permute.xlu0 %41
  %45 = vset.pattern.permute.xlu0 0
  %46 = vperm.xlu0 %45, %v32
  %v47 = vpop.permute.xlu0 %46
  %50 = vset.pattern.permute.xlu0 0
  %51 = vperm.xlu0 %50, %v33
  %v52 = vpop.permute.xlu0 %51
  %55 = vset.pattern.permute.xlu0 0
  %56 = vperm.xlu0 %55, %v34
  %v57 = vpop.permute.xlu0 %56
  %60 = vset.pattern.permute.xlu0 0
  %61 = vperm.xlu0 %60, %v35
  %v62 = vpop.permute.xlu0 %61
  %65 = vset.pattern.permute.xlu0 0
  %66 = vperm.xlu0 %65, %v36
  %v67 = vpop.permute.xlu0 %66
  %70 = vset.pattern.permute.xlu0 0
  %71 = vperm.xlu0 %70, %v37
  %v72 = vpop.permute.xlu0 %71
  %75 = vset.pattern.permute.xlu0 0
  %76 = vperm.xlu0 %75, %v38
  %v77 = vpop.permute.xlu0 %76
  %v87 = vunpack.c.l.b16 %v23
  %v88 = vunpack.c.l.b16 %v24
  %v89 = vunpack.c.l.b16 %v25
  %v90 = vunpack.c.l.b16 %v26
  %v91 = vunpack.c.l.b16 %v27
  %v92 = vunpack.c.l.b16 %v28
  %v93 = vunpack.c.l.b16 %v29
  %v94 = vunpack.c.l.b16 %v30
  %v95 = vpack.c.b16 %v88, %v87
  %v96 = vpack.c.b16 %v90, %v89
  %v97 = vpack.c.b16 %v92, %v91
  %v98 = vpack.c.b16 %v94, %v93
  %v107 = vunpack.c.l.b16 %v15
  %v108 = vunpack.c.l.b16 %v16
  %v109 = vunpack.c.l.b16 %v17
  %v110 = vunpack.c.l.b16 %v18
  %v111 = vunpack.c.l.b16 %v19
  %v112 = vunpack.c.l.b16 %v20
  %v113 = vunpack.c.l.b16 %v21
  %v114 = vunpack.c.l.b16 %v22
  %v115 = vpack.c.b16 %v108, %v107
  %v116 = vpack.c.b16 %v110, %v109
  %v117 = vpack.c.b16 %v112, %v111
  %v118 = vpack.c.b16 %v114, %v113
  %vm123 = vcmask 523264
  %v125 = vsel %vm123, %v95, 0
  %v128 = vsel %vm123, %v96, 0
  %v131 = vsel %vm123, %v97, 0
  %v134 = vsel %vm123, %v98, 0
  %136 = vmatprep.subr.bf16.mxu0 0
  %137 = vmatpush1.bf16.msra.mxu0 %v115
  %138 = vmatprep.subr.bf16.mxu0 0
  %139 = vmatpush1.bf16.msra.mxu0 %v116
  %140 = vmatprep.subr.bf16.mxu0 0
  %141 = vmatpush1.bf16.msra.mxu0 %v117
  %142 = vmatprep.subr.bf16.mxu0 0
  %143 = vmatpush1.bf16.msra.mxu0 %v118
  %144 = vmatprep.subr.bf16.mxu0 0
  %145 = vmatpush1.bf16.msra.mxu0 0
  %146 = vmatprep.subr.bf16.mxu0 0
  %147 = vmatpush1.bf16.msra.mxu0 0
  %148 = vmatprep.subr.bf16.mxu0 0
  %149 = vmatpush1.bf16.msra.mxu0 0
  %150 = vmatprep.subr.bf16.mxu0 0
  %151 = vmatpush1.bf16.msra.mxu0 0
  %152 = vmatprep.subr.bf16.mxu0 0
  %153 = vmatpush1.bf16.msra.mxu0 0
  %154 = vmatprep.subr.bf16.mxu0 0
  %155 = vmatpush1.bf16.msra.mxu0 0
  %156 = vmatprep.subr.bf16.mxu0 0
  %157 = vmatpush1.bf16.msra.mxu0 0
  %158 = vmatprep.subr.bf16.mxu0 0
  %159 = vmatpush1.bf16.msra.mxu0 0
  %160 = vmatprep.subr.bf16.mxu0 0
  %161 = vmatpush1.bf16.msra.mxu0 0
  %162 = vmatprep.subr.bf16.mxu0 0
  %163 = vmatpush1.bf16.msra.mxu0 0
  %164 = vmatprep.subr.bf16.mxu0 0
  %165 = vmatpush1.bf16.msra.mxu0 0
  %166 = vmatprep.subr.bf16.mxu0 0
  %167 = vmatpush1.bf16.msra.mxu0 0
  %168 = vmatprep.mubr.bf16.mxu0 0
  %169 = vmatmul.mubr.bf16.gmra.mrb[0].mxu0 %v125
  %v170 = vpop.f32.mrb[0].mxu0
  %v171 = vadd.f32 %v42, %v170
  %v172 = vpop.f32.mrb[0].mxu0
  %v173 = vpop.f32.mrb[0].mxu0
  %v174 = vadd.f32 %v47, %v173
  %v175 = vpop.f32.mrb[0].mxu0
  %176 = vmatprep.mubr.bf16.mxu0 0
  %177 = vmatmul.mubr.bf16.gmra.mrb[0].mxu0 %v128
  %v178 = vpop.f32.mrb[0].mxu0
  %v179 = vadd.f32 %v52, %v178
  %v180 = vpop.f32.mrb[0].mxu0
  %v181 = vpop.f32.mrb[0].mxu0
  %v182 = vadd.f32 %v57, %v181
  %v183 = vpop.f32.mrb[0].mxu0
  %184 = vmatprep.mubr.bf16.mxu0 0
  %185 = vmatmul.mubr.bf16.gmra.mrb[0].mxu0 %v131
  %v186 = vpop.f32.mrb[0].mxu0
  %v187 = vadd.f32 %v62, %v186
  %v188 = vpop.f32.mrb[0].mxu0
  %v189 = vpop.f32.mrb[0].mxu0
  %v190 = vadd.f32 %v67, %v189
  %v191 = vpop.f32.mrb[0].mxu0
  %192 = vmatprep.mubr.bf16.mxu0 0
  %193 = vmatmul.mubr.bf16.gmra.mrb[0].mxu0 %v134
  %v194 = vpop.f32.mrb[0].mxu0
  %v195 = vadd.f32 %v72, %v194
  %v196 = vpop.f32.mrb[0].mxu0
  %v197 = vpop.f32.mrb[0].mxu0
  %v198 = vadd.f32 %v77, %v197
  %v199 = vpop.f32.mrb[0].mxu0
  %200 = vdwg.mxu0
  %v201 = vmax.f32 %v171, 0.0
  %v202 = vmax.f32 %v174, 0.0
  %v203 = vmax.f32 %v179, 0.0
  %v204 = vmax.f32 %v182, 0.0
  %v205 = vmax.f32 %v187, 0.0
  %v206 = vmax.f32 %v190, 0.0
  %v207 = vmax.f32 %v195, 0.0
  %v208 = vmax.f32 %v198, 0.0
  %v209 = vpack.c.bf16 %v202, %v201
  %v210 = vpack.c.bf16 %v204, %v203
  %v211 = vpack.c.bf16 %v206, %v205
  %v212 = vpack.c.bf16 %v208, %v207
  %s213 = scalar_lea.vmem %s1, 32
  %v214 = vld [vmem:[%s213] sm:$0xf]
  %v215 = vld [vmem:[%s213 + $0x4] sm:$0xf]
  %v216 = vld [vmem:[%s213 + $0x8] sm:$0xf]
  %v217 = vld [vmem:[%s213 + $0xc] sm:$0xf]
  %v218 = vld [vmem:[%s213 + $0x10] sm:$0xf]
  %v219 = vld [vmem:[%s213 + $0x14] sm:$0xf]
  %v220 = vld [vmem:[%s213 + $0x18] sm:$0xf]
  %v221 = vld [vmem:[%s213 + $0x1c] sm:$0xf]
  %s222 = scalar_lea.vmem %s2, 64
  %v223 = vld [vmem:[%s222] sm:$0xff]
  %v224 = vld [vmem:[%s222 + $0x8] sm:$0xff]
  %v225 = vld [vmem:[%s222 + $0x10] sm:$0xff]
  %v226 = vld [vmem:[%s222 + $0x18] sm:$0xff]
  %v227 = vld [vmem:[%s222 + $0x20] sm:$0xff]
  %v228 = vld [vmem:[%s222 + $0x28] sm:$0xff]
  %v229 = vld [vmem:[%s222 + $0x30] sm:$0xff]
  %v230 = vld [vmem:[%s222 + $0x38] sm:$0xff]
  %232 = vset.pattern.permute.xlu0 0
  %233 = vperm.xlu0 %232, %v223
  %v234 = vpop.permute.xlu0 %233
  %237 = vset.pattern.permute.xlu0 0
  %238 = vperm.xlu0 %237, %v224
  %v239 = vpop.permute.xlu0 %238
  %242 = vset.pattern.permute.xlu0 0
  %243 = vperm.xlu0 %242, %v225
  %v244 = vpop.permute.xlu0 %243
  %247 = vset.pattern.permute.xlu0 0
  %248 = vperm.xlu0 %247, %v226
  %v249 = vpop.permute.xlu0 %248
  %252 = vset.pattern.permute.xlu0 0
  %253 = vperm.xlu0 %252, %v227
  %v254 = vpop.permute.xlu0 %253
  %257 = vset.pattern.permute.xlu0 0
  %258 = vperm.xlu0 %257, %v228
  %v259 = vpop.permute.xlu0 %258
  %262 = vset.pattern.permute.xlu0 0
  %263 = vperm.xlu0 %262, %v229
  %v264 = vpop.permute.xlu0 %263
  %267 = vset.pattern.permute.xlu0 0
  %268 = vperm.xlu0 %267, %v230
  %v269 = vpop.permute.xlu0 %268
  %v279 = vunpack.c.l.b16 %v214
  %v280 = vunpack.c.l.b16 %v215
  %v281 = vunpack.c.l.b16 %v216
  %v282 = vunpack.c.l.b16 %v217
  %v283 = vunpack.c.l.b16 %v218
  %v284 = vunpack.c.l.b16 %v219
  %v285 = vunpack.c.l.b16 %v220
  %v286 = vunpack.c.l.b16 %v221
  %v287 = vpack.c.b16 %v280, %v279
  %v288 = vpack.c.b16 %v282, %v281
  %v289 = vpack.c.b16 %v284, %v283
  %v290 = vpack.c.b16 %v286, %v285
  %v292 = vsel %vm123, %v287, 0
  %v295 = vsel %vm123, %v288, 0
  %v298 = vsel %vm123, %v289, 0
  %v301 = vsel %vm123, %v290, 0
  %303 = vmatprep.subr.bf16.mxu0 0
  %304 = vmatpush1.bf16.msra.mxu0 %v209
  %305 = vmatprep.subr.bf16.mxu0 0
  %306 = vmatpush1.bf16.msra.mxu0 %v210
  %307 = vmatprep.subr.bf16.mxu0 0
  %308 = vmatpush1.bf16.msra.mxu0 %v211
  %309 = vmatprep.subr.bf16.mxu0 0
  %310 = vmatpush1.bf16.msra.mxu0 %v212
  %311 = vmatprep.subr.bf16.mxu0 0
  %312 = vmatpush1.bf16.msra.mxu0 0
  %313 = vmatprep.subr.bf16.mxu0 0
  %314 = vmatpush1.bf16.msra.mxu0 0
  %315 = vmatprep.subr.bf16.mxu0 0
  %316 = vmatpush1.bf16.msra.mxu0 0
  %317 = vmatprep.subr.bf16.mxu0 0
  %318 = vmatpush1.bf16.msra.mxu0 0
  %319 = vmatprep.subr.bf16.mxu0 0
  %320 = vmatpush1.bf16.msra.mxu0 0
  %321 = vmatprep.subr.bf16.mxu0 0
  %322 = vmatpush1.bf16.msra.mxu0 0
  %323 = vmatprep.subr.bf16.mxu0 0
  %324 = vmatpush1.bf16.msra.mxu0 0
  %325 = vmatprep.subr.bf16.mxu0 0
  %326 = vmatpush1.bf16.msra.mxu0 0
  %327 = vmatprep.subr.bf16.mxu0 0
  %328 = vmatpush1.bf16.msra.mxu0 0
  %329 = vmatprep.subr.bf16.mxu0 0
  %330 = vmatpush1.bf16.msra.mxu0 0
  %331 = vmatprep.subr.bf16.mxu0 0
  %332 = vmatpush1.bf16.msra.mxu0 0
  %333 = vmatprep.subr.bf16.mxu0 0
  %334 = vmatpush1.bf16.msra.mxu0 0
  %335 = vmatprep.mubr.bf16.mxu0 0
  %336 = vmatmul.mubr.bf16.gmra.mrb[0].mxu0 %v292
  %v337 = vpop.f32.mrb[0].mxu0
  %v338 = vadd.f32 %v234, %v337
  %v339 = vpop.f32.mrb[0].mxu0
  %v340 = vpop.f32.mrb[0].mxu0
  %v341 = vadd.f32 %v239, %v340
  %v342 = vpop.f32.mrb[0].mxu0
  %343 = vmatprep.mubr.bf16.mxu0 0
  %344 = vmatmul.mubr.bf16.gmra.mrb[0].mxu0 %v295
  %v345 = vpop.f32.mrb[0].mxu0
  %v346 = vadd.f32 %v244, %v345
  %v347 = vpop.f32.mrb[0].mxu0
  %v348 = vpop.f32.mrb[0].mxu0
  %v349 = vadd.f32 %v249, %v348
  %v350 = vpop.f32.mrb[0].mxu0
  %351 = vmatprep.mubr.bf16.mxu0 0
  %352 = vmatmul.mubr.bf16.gmra.mrb[0].mxu0 %v298
  %v353 = vpop.f32.mrb[0].mxu0
  %v354 = vadd.f32 %v254, %v353
  %v355 = vpop.f32.mrb[0].mxu0
  %v356 = vpop.f32.mrb[0].mxu0
  %v357 = vadd.f32 %v259, %v356
  %v358 = vpop.f32.mrb[0].mxu0
  %359 = vmatprep.mubr.bf16.mxu0 0
  %360 = vmatmul.mubr.bf16.gmra.mrb[0].mxu0 %v301
  %v361 = vpop.f32.mrb[0].mxu0
  %v362 = vadd.f32 %v264, %v361
  %v363 = vpop.f32.mrb[0].mxu0
  %v364 = vpop.f32.mrb[0].mxu0
  %v365 = vadd.f32 %v269, %v364
  %v366 = vpop.f32.mrb[0].mxu0
  %367 = vdwg.mxu0
  %v368 = vmax.f32 %v338, 0.0
  %v369 = vmax.f32 %v341, 0.0
  %v370 = vmax.f32 %v346, 0.0
  %v371 = vmax.f32 %v349, 0.0
  %v372 = vmax.f32 %v354, 0.0
  %v373 = vmax.f32 %v357, 0.0
  %v374 = vmax.f32 %v362, 0.0
  %v375 = vmax.f32 %v365, 0.0
  %v376 = vpack.c.bf16 %v369, %v368
  %v377 = vpack.c.bf16 %v371, %v370
  %v378 = vpack.c.bf16 %v373, %v372
  %v379 = vpack.c.bf16 %v375, %v374
  %s380 = scalar_lea.vmem %s1, 64
  %v381 = vld [vmem:[%s380] sm:$0xf]
  %v382 = vld [vmem:[%s380 + $0x4] sm:$0xf]
  %v383 = vld [vmem:[%s380 + $0x8] sm:$0xf]
  %v384 = vld [vmem:[%s380 + $0xc] sm:$0xf]
  %v385 = vld [vmem:[%s380 + $0x10] sm:$0xf]
  %v386 = vld [vmem:[%s380 + $0x14] sm:$0xf]
  %v387 = vld [vmem:[%s380 + $0x18] sm:$0xf]
  %v388 = vld [vmem:[%s380 + $0x1c] sm:$0xf]
  %s389 = scalar_lea.vmem %s2, 128
  %v390 = vld [vmem:[%s389] sm:$0xff]
  %v391 = vld [vmem:[%s389 + $0x8] sm:$0xff]
  %v392 = vld [vmem:[%s389 + $0x10] sm:$0xff]
  %v393 = vld [vmem:[%s389 + $0x18] sm:$0xff]
  %v394 = vld [vmem:[%s389 + $0x20] sm:$0xff]
  %v395 = vld [vmem:[%s389 + $0x28] sm:$0xff]
  %v396 = vld [vmem:[%s389 + $0x30] sm:$0xff]
  %v397 = vld [vmem:[%s389 + $0x38] sm:$0xff]
  %399 = vset.pattern.permute.xlu0 0
  %400 = vperm.xlu0 %399, %v390
  %v401 = vpop.permute.xlu0 %400
  %404 = vset.pattern.permute.xlu0 0
  %405 = vperm.xlu0 %404, %v391
  %v406 = vpop.permute.xlu0 %405
  %409 = vset.pattern.permute.xlu0 0
  %410 = vperm.xlu0 %409, %v392
  %v411 = vpop.permute.xlu0 %410
  %414 = vset.pattern.permute.xlu0 0
  %415 = vperm.xlu0 %414, %v393
  %v416 = vpop.permute.xlu0 %415
  %419 = vset.pattern.permute.xlu0 0
  %420 = vperm.xlu0 %419, %v394
  %v421 = vpop.permute.xlu0 %420
  %424 = vset.pattern.permute.xlu0 0
  %425 = vperm.xlu0 %424, %v395
  %v426 = vpop.permute.xlu0 %425
  %429 = vset.pattern.permute.xlu0 0
  %430 = vperm.xlu0 %429, %v396
  %v431 = vpop.permute.xlu0 %430
  %434 = vset.pattern.permute.xlu0 0
  %435 = vperm.xlu0 %434, %v397
  %v436 = vpop.permute.xlu0 %435
  %v446 = vunpack.c.l.b16 %v381
  %v447 = vunpack.c.l.b16 %v382
  %v448 = vunpack.c.l.b16 %v383
  %v449 = vunpack.c.l.b16 %v384
  %v450 = vunpack.c.l.b16 %v385
  %v451 = vunpack.c.l.b16 %v386
  %v452 = vunpack.c.l.b16 %v387
  %v453 = vunpack.c.l.b16 %v388
  %v454 = vpack.c.b16 %v447, %v446
  %v455 = vpack.c.b16 %v449, %v448
  %v456 = vpack.c.b16 %v451, %v450
  %v457 = vpack.c.b16 %v453, %v452
  %v459 = vsel %vm123, %v454, 0
  %v462 = vsel %vm123, %v455, 0
  %v465 = vsel %vm123, %v456, 0
  %v468 = vsel %vm123, %v457, 0
  %470 = vmatprep.subr.bf16.mxu0 0
  %471 = vmatpush1.bf16.msra.mxu0 %v376
  %472 = vmatprep.subr.bf16.mxu0 0
  %473 = vmatpush1.bf16.msra.mxu0 %v377
  %474 = vmatprep.subr.bf16.mxu0 0
  %475 = vmatpush1.bf16.msra.mxu0 %v378
  %476 = vmatprep.subr.bf16.mxu0 0
  %477 = vmatpush1.bf16.msra.mxu0 %v379
  %478 = vmatprep.subr.bf16.mxu0 0
  %479 = vmatpush1.bf16.msra.mxu0 0
  %480 = vmatprep.subr.bf16.mxu0 0
  %481 = vmatpush1.bf16.msra.mxu0 0
  %482 = vmatprep.subr.bf16.mxu0 0
  %483 = vmatpush1.bf16.msra.mxu0 0
  %484 = vmatprep.subr.bf16.mxu0 0
  %485 = vmatpush1.bf16.msra.mxu0 0
  %486 = vmatprep.subr.bf16.mxu0 0
  %487 = vmatpush1.bf16.msra.mxu0 0
  %488 = vmatprep.subr.bf16.mxu0 0
  %489 = vmatpush1.bf16.msra.mxu0 0
  %490 = vmatprep.subr.bf16.mxu0 0
  %491 = vmatpush1.bf16.msra.mxu0 0
  %492 = vmatprep.subr.bf16.mxu0 0
  %493 = vmatpush1.bf16.msra.mxu0 0
  %494 = vmatprep.subr.bf16.mxu0 0
  %495 = vmatpush1.bf16.msra.mxu0 0
  %496 = vmatprep.subr.bf16.mxu0 0
  %497 = vmatpush1.bf16.msra.mxu0 0
  %498 = vmatprep.subr.bf16.mxu0 0
  %499 = vmatpush1.bf16.msra.mxu0 0
  %500 = vmatprep.subr.bf16.mxu0 0
  %501 = vmatpush1.bf16.msra.mxu0 0
  %502 = vmatprep.mubr.bf16.mxu0 0
  %503 = vmatmul.mubr.bf16.gmra.mrb[0].mxu0 %v459
  %v504 = vpop.f32.mrb[0].mxu0
  %v505 = vadd.f32 %v401, %v504
  %v506 = vpop.f32.mrb[0].mxu0
  %v507 = vpop.f32.mrb[0].mxu0
  %v508 = vadd.f32 %v406, %v507
  %v509 = vpop.f32.mrb[0].mxu0
  %510 = vmatprep.mubr.bf16.mxu0 0
  %511 = vmatmul.mubr.bf16.gmra.mrb[0].mxu0 %v462
  %v512 = vpop.f32.mrb[0].mxu0
  %v513 = vadd.f32 %v411, %v512
  %v514 = vpop.f32.mrb[0].mxu0
  %v515 = vpop.f32.mrb[0].mxu0
  %v516 = vadd.f32 %v416, %v515
  %v517 = vpop.f32.mrb[0].mxu0
  %518 = vmatprep.mubr.bf16.mxu0 0
  %519 = vmatmul.mubr.bf16.gmra.mrb[0].mxu0 %v465
  %v520 = vpop.f32.mrb[0].mxu0
  %v521 = vadd.f32 %v421, %v520
  %v522 = vpop.f32.mrb[0].mxu0
  %v523 = vpop.f32.mrb[0].mxu0
  %v524 = vadd.f32 %v426, %v523
  %v525 = vpop.f32.mrb[0].mxu0
  %526 = vmatprep.mubr.bf16.mxu0 0
  %527 = vmatmul.mubr.bf16.gmra.mrb[0].mxu0 %v468
  %v528 = vpop.f32.mrb[0].mxu0
  %v529 = vadd.f32 %v431, %v528
  %v530 = vpop.f32.mrb[0].mxu0
  %v531 = vpop.f32.mrb[0].mxu0
  %v532 = vadd.f32 %v436, %v531
  %v533 = vpop.f32.mrb[0].mxu0
  %534 = vdwg.mxu0
  %v535 = vmax.f32 %v505, 0.0
  %v536 = vmax.f32 %v508, 0.0
  %v537 = vmax.f32 %v513, 0.0
  %v538 = vmax.f32 %v516, 0.0
  %v539 = vmax.f32 %v521, 0.0
  %v540 = vmax.f32 %v524, 0.0
  %v541 = vmax.f32 %v529, 0.0
  %v542 = vmax.f32 %v532, 0.0
  %v543 = vpack.c.bf16 %v536, %v535
  %v544 = vpack.c.bf16 %v538, %v537
  %v545 = vpack.c.bf16 %v540, %v539
  %v546 = vpack.c.bf16 %v542, %v541
  %s547 = scalar_lea.vmem %s1, 96
  %v548 = vld [vmem:[%s547] sm:$0xf]
  %v549 = vld [vmem:[%s547 + $0x4] sm:$0xf]
  %v550 = vld [vmem:[%s547 + $0x8] sm:$0xf]
  %v551 = vld [vmem:[%s547 + $0xc] sm:$0xf]
  %v552 = vld [vmem:[%s547 + $0x10] sm:$0xf]
  %v553 = vld [vmem:[%s547 + $0x14] sm:$0xf]
  %v554 = vld [vmem:[%s547 + $0x18] sm:$0xf]
  %v555 = vld [vmem:[%s547 + $0x1c] sm:$0xf]
  %s556 = scalar_lea.vmem %s2, 192
  %v557 = vld [vmem:[%s556] sm:$0xff]
  %v558 = vld [vmem:[%s556 + $0x8] sm:$0xff]
  %v559 = vld [vmem:[%s556 + $0x10] sm:$0xff]
  %v560 = vld [vmem:[%s556 + $0x18] sm:$0xff]
  %v561 = vld [vmem:[%s556 + $0x20] sm:$0xff]
  %v562 = vld [vmem:[%s556 + $0x28] sm:$0xff]
  %v563 = vld [vmem:[%s556 + $0x30] sm:$0xff]
  %v564 = vld [vmem:[%s556 + $0x38] sm:$0xff]
  %566 = vset.pattern.permute.xlu0 0
  %567 = vperm.xlu0 %566, %v557
  %v568 = vpop.permute.xlu0 %567
  %571 = vset.pattern.permute.xlu0 0
  %572 = vperm.xlu0 %571, %v558
  %v573 = vpop.permute.xlu0 %572
  %576 = vset.pattern.permute.xlu0 0
  %577 = vperm.xlu0 %576, %v559
  %v578 = vpop.permute.xlu0 %577
  %581 = vset.pattern.permute.xlu0 0
  %582 = vperm.xlu0 %581, %v560
  %v583 = vpop.permute.xlu0 %582
  %586 = vset.pattern.permute.xlu0 0
  %587 = vperm.xlu0 %586, %v561
  %v588 = vpop.permute.xlu0 %587
  %591 = vset.pattern.permute.xlu0 0
  %592 = vperm.xlu0 %591, %v562
  %v593 = vpop.permute.xlu0 %592
  %596 = vset.pattern.permute.xlu0 0
  %597 = vperm.xlu0 %596, %v563
  %v598 = vpop.permute.xlu0 %597
  %601 = vset.pattern.permute.xlu0 0
  %602 = vperm.xlu0 %601, %v564
  %v603 = vpop.permute.xlu0 %602
  %v613 = vunpack.c.l.b16 %v548
  %v614 = vunpack.c.l.b16 %v549
  %v615 = vunpack.c.l.b16 %v550
  %v616 = vunpack.c.l.b16 %v551
  %v617 = vunpack.c.l.b16 %v552
  %v618 = vunpack.c.l.b16 %v553
  %v619 = vunpack.c.l.b16 %v554
  %v620 = vunpack.c.l.b16 %v555
  %v621 = vpack.c.b16 %v614, %v613
  %v622 = vpack.c.b16 %v616, %v615
  %v623 = vpack.c.b16 %v618, %v617
  %v624 = vpack.c.b16 %v620, %v619
  %v626 = vsel %vm123, %v621, 0
  %v629 = vsel %vm123, %v622, 0
  %v632 = vsel %vm123, %v623, 0
  %v635 = vsel %vm123, %v624, 0
  %637 = vmatprep.subr.bf16.mxu0 0
  %638 = vmatpush1.bf16.msra.mxu0 %v543
  %639 = vmatprep.subr.bf16.mxu0 0
  %640 = vmatpush1.bf16.msra.mxu0 %v544
  %641 = vmatprep.subr.bf16.mxu0 0
  %642 = vmatpush1.bf16.msra.mxu0 %v545
  %643 = vmatprep.subr.bf16.mxu0 0
  %644 = vmatpush1.bf16.msra.mxu0 %v546
  %645 = vmatprep.subr.bf16.mxu0 0
  %646 = vmatpush1.bf16.msra.mxu0 0
  %647 = vmatprep.subr.bf16.mxu0 0
  %648 = vmatpush1.bf16.msra.mxu0 0
  %649 = vmatprep.subr.bf16.mxu0 0
  %650 = vmatpush1.bf16.msra.mxu0 0
  %651 = vmatprep.subr.bf16.mxu0 0
  %652 = vmatpush1.bf16.msra.mxu0 0
  %653 = vmatprep.subr.bf16.mxu0 0
  %654 = vmatpush1.bf16.msra.mxu0 0
  %655 = vmatprep.subr.bf16.mxu0 0
  %656 = vmatpush1.bf16.msra.mxu0 0
  %657 = vmatprep.subr.bf16.mxu0 0
  %658 = vmatpush1.bf16.msra.mxu0 0
  %659 = vmatprep.subr.bf16.mxu0 0
  %660 = vmatpush1.bf16.msra.mxu0 0
  %661 = vmatprep.subr.bf16.mxu0 0
  %662 = vmatpush1.bf16.msra.mxu0 0
  %663 = vmatprep.subr.bf16.mxu0 0
  %664 = vmatpush1.bf16.msra.mxu0 0
  %665 = vmatprep.subr.bf16.mxu0 0
  %666 = vmatpush1.bf16.msra.mxu0 0
  %667 = vmatprep.subr.bf16.mxu0 0
  %668 = vmatpush1.bf16.msra.mxu0 0
  %669 = vmatprep.mubr.bf16.mxu0 0
  %670 = vmatmul.mubr.bf16.gmra.mrb[0].mxu0 %v626
  %v671 = vpop.f32.mrb[0].mxu0
  %v672 = vadd.f32 %v568, %v671
  %v673 = vpop.f32.mrb[0].mxu0
  %v674 = vpop.f32.mrb[0].mxu0
  %v675 = vadd.f32 %v573, %v674
  %v676 = vpop.f32.mrb[0].mxu0
  %677 = vmatprep.mubr.bf16.mxu0 0
  %678 = vmatmul.mubr.bf16.gmra.mrb[0].mxu0 %v629
  %v679 = vpop.f32.mrb[0].mxu0
  %v680 = vadd.f32 %v578, %v679
  %v681 = vpop.f32.mrb[0].mxu0
  %v682 = vpop.f32.mrb[0].mxu0
  %v683 = vadd.f32 %v583, %v682
  %v684 = vpop.f32.mrb[0].mxu0
  %685 = vmatprep.mubr.bf16.mxu0 0
  %686 = vmatmul.mubr.bf16.gmra.mrb[0].mxu0 %v632
  %v687 = vpop.f32.mrb[0].mxu0
  %v688 = vadd.f32 %v588, %v687
  %v689 = vpop.f32.mrb[0].mxu0
  %v690 = vpop.f32.mrb[0].mxu0
  %v691 = vadd.f32 %v593, %v690
  %v692 = vpop.f32.mrb[0].mxu0
  %693 = vmatprep.mubr.bf16.mxu0 0
  %694 = vmatmul.mubr.bf16.gmra.mrb[0].mxu0 %v635
  %v695 = vpop.f32.mrb[0].mxu0
  %v696 = vadd.f32 %v598, %v695
  %v697 = vpop.f32.mrb[0].mxu0
  %v698 = vpop.f32.mrb[0].mxu0
  %v699 = vadd.f32 %v603, %v698
  %v700 = vpop.f32.mrb[0].mxu0
  %701 = vdwg.mxu0
  %v702 = vmax.f32 %v672, 0.0
  %v703 = vmax.f32 %v675, 0.0
  %v704 = vmax.f32 %v680, 0.0
  %v705 = vmax.f32 %v683, 0.0
  %v706 = vmax.f32 %v688, 0.0
  %v707 = vmax.f32 %v691, 0.0
  %v708 = vmax.f32 %v696, 0.0
  %v709 = vmax.f32 %v699, 0.0
  %s710 = scalar_lea.vmem %s1, 128
  %v711 = vld [vmem:[%s710] sm:$0xf]
  %v712 = vld [vmem:[%s710 + $0x4] sm:$0xf]
  %v713 = vld [vmem:[%s710 + $0x8] sm:$0xf]
  %v714 = vld [vmem:[%s710 + $0xc] sm:$0xf]
  %v715 = vld [vmem:[%s710 + $0x10] sm:$0xf]
  %v716 = vld [vmem:[%s710 + $0x14] sm:$0xf]
  %v717 = vld [vmem:[%s710 + $0x18] sm:$0xf]
  %v718 = vld [vmem:[%s710 + $0x1c] sm:$0xf]
  %v719 = vunpack.c.l.bf16 %v711
  %v720 = vunpack.c.l.bf16 %v712
  %v721 = vunpack.c.l.bf16 %v713
  %v722 = vunpack.c.l.bf16 %v714
  %v723 = vunpack.c.l.bf16 %v715
  %v724 = vunpack.c.l.bf16 %v716
  %v725 = vunpack.c.l.bf16 %v717
  %v726 = vunpack.c.l.bf16 %v718
  %s727 = scalar_lea.vmem %s2, 256
  %v728 = vld [vmem:[%s727] sm:$0xff]
  %730 = vset.pattern.permute.xlu0 0
  %731 = vperm.xlu0 %730, %v719
  %v732 = vpop.permute.xlu0 %731
  %735 = vset.pattern.permute.xlu0 0
  %736 = vperm.xlu0 %735, %v720
  %v737 = vpop.permute.xlu0 %736
  %740 = vset.pattern.permute.xlu0 0
  %741 = vperm.xlu0 %740, %v721
  %v742 = vpop.permute.xlu0 %741
  %745 = vset.pattern.permute.xlu0 0
  %746 = vperm.xlu0 %745, %v722
  %v747 = vpop.permute.xlu0 %746
  %750 = vset.pattern.permute.xlu0 0
  %751 = vperm.xlu0 %750, %v723
  %v752 = vpop.permute.xlu0 %751
  %755 = vset.pattern.permute.xlu0 0
  %756 = vperm.xlu0 %755, %v724
  %v757 = vpop.permute.xlu0 %756
  %760 = vset.pattern.permute.xlu0 0
  %761 = vperm.xlu0 %760, %v725
  %v762 = vpop.permute.xlu0 %761
  %765 = vset.pattern.permute.xlu0 0
  %766 = vperm.xlu0 %765, %v726
  %v767 = vpop.permute.xlu0 %766
  %v769 = vmul.f32 %v702, %v732
  %v770 = vmul.f32 %v703, %v737
  %v771 = vmul.f32 %v704, %v742
  %v772 = vmul.f32 %v705, %v747
  %v773 = vmul.f32 %v706, %v752
  %v774 = vmul.f32 %v707, %v757
  %v775 = vmul.f32 %v708, %v762
  %v776 = vmul.f32 %v709, %v767
  %v777 = vadd.f32 %v769, %v770
  %v778 = vadd.f32 %v777, %v771
  %v779 = vadd.f32 %v778, %v772
  %v780 = vadd.f32 %v779, %v773
  %v781 = vadd.f32 %v780, %v774
  %v782 = vadd.f32 %v781, %v775
  %v783 = vadd.f32 %v782, %v776
  %v784 = vrot.slane %v783, 4
  %v785 = vadd.f32 %v783, %v784
  %v786 = vrot.slane %v785, 2
  %v787 = vadd.f32 %v785, %v786
  %v788 = vrot.slane %v787, 1
  %v789 = vadd.f32 %v787, %v788
  %791 = vset.pattern.permute.xlu0 0
  %792 = vperm.xlu0 %791, %v728
  %v793 = vpop.permute.xlu0 %792
  %v795 = vadd.f32 %v789, %v793
  %796 = vst [vmem:[%s3] sm:$0x1] %v795
  // Predicated region
  $region14: #{net_forward.1} parent=0 // pred_check
    _
  $region15: #{net_forward.1} parent=0 // pred_check_branch
    %798 = sbr.rel (0) target = $region17
  $region16: #{net_forward.1} parent=0 // pred_region
    _
  $region17: #{net_forward.1} parent=0 // pred_fallthru
    _
  // Predicated region
  $region18: #{net_forward.1} parent=0 // pred_check
    _
  $region19: #{net_forward.1} parent=0 // pred_check_branch
    %800 = sbr.rel (0) target = $region21
  $region20: #{net_forward.1} parent=0 // pred_region
    _
  $region21: #{net_forward.1} parent=0 // pred_fallthru
    _

</llo_original>
